<compile_context>
chip_gen: v7x
topology: tpu7x:2x2x1
jax: 0.10.0
libtpu: 0.0.40
codegen_flags: <defaults>
</compile_context>

<pallas_src>
import math

import jax
import jax.numpy as jnp
from jax.experimental import pallas as pl
from jax.experimental.pallas import tpu as pltpu

HEAD_PAD = 128  # padded lane width of the fused (pi|v) head output


def actor_critic_kernel(x_ref, w1_ref, b1_ref, w2_ref, b2_ref,
                        wh_ref, bh_ref, out_ref):
    """One fused forward pass: fc1 -> relu -> fc2 -> relu -> fused (pi|v) head."""
    x = x_ref[...]  # [Bblk, in_dim] float32

    # Weights are stored bf16 (DMA savings); upcast for f32 VPU/MXU math.
    w1 = w1_ref[...].astype(jnp.float32)
    w2 = w2_ref[...].astype(jnp.float32)
    wh = wh_ref[...].astype(jnp.float32)

    # fc1 + ReLU (f32 activations / bias add)
    h1 = jnp.dot(x, w1, preferred_element_type=jnp.float32) + b1_ref[...]
    h1 = jnp.maximum(h1, 0.0)

    # fc2 + ReLU
    h2 = jnp.dot(h1, w2, preferred_element_type=jnp.float32) + b2_ref[...]
    h2 = jnp.maximum(h2, 0.0)

    # Fused actor+critic head: [Bblk, 128] lane-dense output (padded cols are 0).
    out_ref[...] = (jnp.dot(h2, wh, preferred_element_type=jnp.float32)
                    + bh_ref[...]).astype(out_ref.dtype)


def actor_critic_forward(x, kp, *, n_actions, block_b=128):
    """x: [B, input_dim] float32. kp: kernel-ready params from prepare_params()."""
    B, in_dim = x.shape
    fc1 = kp["w1"].shape[1]
    fc2 = kp["w2"].shape[1]
    hp = kp["wh"].shape[1]  # = HEAD_PAD

    operands = (x, kp["w1"], kp["b1"], kp["w2"], kp["b2"], kp["wh"], kp["bh"])
    bytes_accessed = int(sum(a.size * a.dtype.itemsize for a in operands)
                         + B * hp * 4)
    cost = pl.CostEstimate(
        flops=int(2 * B * (in_dim * fc1 + fc1 * fc2 + fc2 * hp)),
        transcendentals=0,
        bytes_accessed=bytes_accessed,
    )

    out_shape = jax.ShapeDtypeStruct((B, hp), jnp.float32)

    if B >= block_b and B % block_b == 0:
        # Gridded path: pipeline x/out DMAs and shard batch blocks across cores.
        out_padded = pl.pallas_call(
            actor_critic_kernel,
            out_shape=out_shape,
            grid=(B // block_b,),
            in_specs=[
                pl.BlockSpec((block_b, in_dim), lambda i: (i, 0)),
                pl.BlockSpec((in_dim, fc1), lambda i: (0, 0)),
                pl.BlockSpec((1, fc1), lambda i: (0, 0)),
                pl.BlockSpec((fc1, fc2), lambda i: (0, 0)),
                pl.BlockSpec((1, fc2), lambda i: (0, 0)),
                pl.BlockSpec((fc2, hp), lambda i: (0, 0)),
                pl.BlockSpec((1, hp), lambda i: (0, 0)),
            ],
            out_specs=pl.BlockSpec((block_b, hp), lambda i: (i, 0)),
            compiler_params=pltpu.CompilerParams(
                dimension_semantics=("parallel",)),
            cost_estimate=cost,
        )(*operands)
    else:
        # Small-batch path: everything fits in VMEM, single kernel invocation.
        vmem = pl.BlockSpec(memory_space=pltpu.MemorySpace.VMEM)
        out_padded = pl.pallas_call(
            actor_critic_kernel,
            out_shape=out_shape,
            in_specs=[vmem] * 7,
            out_specs=vmem,
            cost_estimate=cost,
        )(*operands)

    pi = out_padded[:, :n_actions]
    v = out_padded[:, n_actions:n_actions + 1]
    return pi, v


def init_params(key, input_dim, fc1_dims, fc2_dims, n_actions):
    """nn.Linear-style init (uniform +/- 1/sqrt(fan_in)); weights stored [in, out]."""
    def linear(k, fan_in, fan_out):
        kw, kb = jax.random.split(k)
        bound = 1.0 / math.sqrt(fan_in)
        w = jax.random.uniform(kw, (fan_in, fan_out), jnp.float32, -bound, bound)
        b = jax.random.uniform(kb, (1, fan_out), jnp.float32, -bound, bound)
        return w, b

    k1, k2, k3, k4 = jax.random.split(key, 4)
    w1, b1 = linear(k1, input_dim, fc1_dims)
    w2, b2 = linear(k2, fc1_dims, fc2_dims)
    wpi, bpi = linear(k3, fc2_dims, n_actions)
    wv, bv = linear(k4, fc2_dims, 1)
    return {"w1": w1, "b1": b1, "w2": w2, "b2": b2,
            "wpi": wpi, "bpi": bpi, "wv": wv, "bv": bv}


def prepare_params(params, weights_dtype=jnp.bfloat16):
    """Fuse the pi/v heads, zero-pad the head output dim to 128 lanes, and cast
    weight matrices to bf16 (biases stay float32)."""
    n_actions = params["wpi"].shape[1]
    head_width = n_actions + 1
    pad = HEAD_PAD - head_width
    assert pad >= 0, "n_actions + 1 must be <= 128 for the fused/padded head"

    wh = jnp.concatenate([params["wpi"], params["wv"]], axis=1)   # [fc2, A+1]
    bh = jnp.concatenate([params["bpi"], params["bv"]], axis=1)   # [1,  A+1]
    wh = jnp.pad(wh, ((0, 0), (0, pad)))                          # zero-pad cols
    bh = jnp.pad(bh, ((0, 0), (0, pad)))

    return {
        "w1": params["w1"].astype(weights_dtype),
        "b1": params["b1"].astype(jnp.float32),
        "w2": params["w2"].astype(weights_dtype),
        "b2": params["b2"].astype(jnp.float32),
        "wh": wh.astype(weights_dtype),
        "bh": bh.astype(jnp.float32),
    }


def reference_forward(x, kp, n_actions):
    """Pure-JAX reference using the same kernel-ready (bf16-rounded) weights."""
    w1 = kp["w1"].astype(jnp.float32)
    w2 = kp["w2"].astype(jnp.float32)
    wh = kp["wh"].astype(jnp.float32)
    h1 = jnp.maximum(x @ w1 + kp["b1"], 0.0)
    h2 = jnp.maximum(h1 @ w2 + kp["b2"], 0.0)
    out = h2 @ wh + kp["bh"]
    return out[:, :n_actions], out[:, n_actions:n_actions + 1]


if __name__ == "__main__":
    # Classic-control actor-critic shapes:
    # input_dims=(8,), fc1_dims=256, fc2_dims=256, n_actions=4.
    key = jax.random.PRNGKey(0)
    k_params, k_obs, k_obs_big = jax.random.split(key, 3)

    input_dim, fc1_dims, fc2_dims, n_actions = 8, 256, 256, 4
    batch = 2

    params = init_params(k_params, input_dim, fc1_dims, fc2_dims, n_actions)
    kparams = prepare_params(params)

    fwd = jax.jit(actor_critic_forward, static_argnames=("n_actions", "block_b"))

    # Small-batch (single-block) path.
    obs = jax.random.normal(k_obs, (batch, input_dim), jnp.float32)
    pi, v = fwd(obs, kparams, n_actions=n_actions)
    jax.block_until_ready((pi, v))

    pi_ref, v_ref = reference_forward(obs, kparams, n_actions)
    assert pi.shape == (batch, n_actions) and v.shape == (batch, 1)
    assert jnp.allclose(pi, pi_ref, atol=1e-3, rtol=1e-3)
    assert jnp.allclose(v, v_ref, atol=1e-3, rtol=1e-3)

    # Larger batch exercises the gridded / pipelined (megacore-parallel) path.
    big_batch = 256
    obs_big = jax.random.normal(k_obs_big, (big_batch, input_dim), jnp.float32)
    pi_b, v_b = fwd(obs_big, kparams, n_actions=n_actions)
    jax.block_until_ready((pi_b, v_b))

    pi_bref, v_bref = reference_forward(obs_big, kparams, n_actions)
    assert pi_b.shape == (big_batch, n_actions) and v_b.shape == (big_batch, 1)
    assert jnp.allclose(pi_b, pi_bref, atol=1e-3, rtol=1e-3)
    assert jnp.allclose(v_b, v_bref, atol=1e-3, rtol=1e-3)

    # TODO(synk): optimizer (Adam) / device-transfer glue from the PyTorch module
    # is training infrastructure, not part of the forward pass, and is omitted.
    print("KERNEL_OK")
</pallas_src>

<mosaic_0001>
module attributes {stable_mosaic.version = 11 : i64} {
  func.func @actor_critic_kernel(%arg0: memref<2x8xf32, #tpu.memory_space<vmem>>, %arg1: memref<8x256xbf16, #tpu.memory_space<vmem>>, %arg2: memref<1x256xf32, #tpu.memory_space<vmem>>, %arg3: memref<256x256xbf16, #tpu.memory_space<vmem>>, %arg4: memref<1x256xf32, #tpu.memory_space<vmem>>, %arg5: memref<256x128xbf16, #tpu.memory_space<vmem>>, %arg6: memref<1x128xf32, #tpu.memory_space<vmem>>, %arg7: memref<2x128xf32, #tpu.memory_space<vmem>>) attributes {dimension_semantics = [], scalar_prefetch = 0 : i64, scratch_operands = 0 : i64, tpu.core_type = #tpu.core_type<tc>} {
    %c0 = arith.constant 0 : index
    %c0_0 = arith.constant 0 : index
    %0 = vector.load %arg0[%c0, %c0_0] : memref<2x8xf32, #tpu.memory_space<vmem>>, vector<2x8xf32>
    %c0_1 = arith.constant 0 : index
    %c0_2 = arith.constant 0 : index
    %1 = vector.load %arg1[%c0_1, %c0_2] : memref<8x256xbf16, #tpu.memory_space<vmem>>, vector<8x256xbf16>
    %2 = arith.extf %1 : vector<8x256xbf16> to vector<8x256xf32>
    %c0_3 = arith.constant 0 : index
    %c0_4 = arith.constant 0 : index
    %3 = vector.load %arg3[%c0_3, %c0_4] : memref<256x256xbf16, #tpu.memory_space<vmem>>, vector<256x256xbf16>
    %4 = arith.extf %3 : vector<256x256xbf16> to vector<256x256xf32>
    %c0_5 = arith.constant 0 : index
    %c0_6 = arith.constant 0 : index
    %5 = vector.load %arg5[%c0_5, %c0_6] : memref<256x128xbf16, #tpu.memory_space<vmem>>, vector<256x128xbf16>
    %6 = arith.extf %5 : vector<256x128xbf16> to vector<256x128xf32>
    %cst = arith.constant dense<0.000000e+00> : vector<2x256xf32>
    %7 = tpu.matmul %0, %2, %cst {dimension_numbers = #tpu.dot_dimension_numbers<[1], [0], [0], [1], [0, 0, 1, 1], [], []>} : vector<2x8xf32>, vector<8x256xf32>, vector<2x256xf32> -> vector<2x256xf32>
    %c0_7 = arith.constant 0 : index
    %c0_8 = arith.constant 0 : index
    %8 = vector.load %arg2[%c0_7, %c0_8] : memref<1x256xf32, #tpu.memory_space<vmem>>, vector<1x256xf32>
    %9 = vector.broadcast %8 : vector<1x256xf32> to vector<2x256xf32>
    %10 = arith.addf %7, %9 : vector<2x256xf32>
    %cst_9 = arith.constant 0.000000e+00 : f32
    %11 = vector.broadcast %cst_9 : f32 to vector<2x256xf32>
    %12 = arith.maximumf %10, %11 : vector<2x256xf32>
    %cst_10 = arith.constant dense<0.000000e+00> : vector<2x256xf32>
    %13 = tpu.matmul %12, %4, %cst_10 {dimension_numbers = #tpu.dot_dimension_numbers<[1], [0], [0], [1], [0, 0, 1, 1], [], []>} : vector<2x256xf32>, vector<256x256xf32>, vector<2x256xf32> -> vector<2x256xf32>
    %c0_11 = arith.constant 0 : index
    %c0_12 = arith.constant 0 : index
    %14 = vector.load %arg4[%c0_11, %c0_12] : memref<1x256xf32, #tpu.memory_space<vmem>>, vector<1x256xf32>
    %15 = vector.broadcast %14 : vector<1x256xf32> to vector<2x256xf32>
    %16 = arith.addf %13, %15 : vector<2x256xf32>
    %cst_13 = arith.constant 0.000000e+00 : f32
    %17 = vector.broadcast %cst_13 : f32 to vector<2x256xf32>
    %18 = arith.maximumf %16, %17 : vector<2x256xf32>
    %cst_14 = arith.constant dense<0.000000e+00> : vector<2x128xf32>
    %19 = tpu.matmul %18, %6, %cst_14 {dimension_numbers = #tpu.dot_dimension_numbers<[1], [0], [0], [1], [0, 0, 1, 1], [], []>} : vector<2x256xf32>, vector<256x128xf32>, vector<2x128xf32> -> vector<2x128xf32>
    %c0_15 = arith.constant 0 : index
    %c0_16 = arith.constant 0 : index
    %20 = vector.load %arg6[%c0_15, %c0_16] : memref<1x128xf32, #tpu.memory_space<vmem>>, vector<1x128xf32>
    %21 = vector.broadcast %20 : vector<1x128xf32> to vector<2x128xf32>
    %22 = arith.addf %19, %21 : vector<2x128xf32>
    %c0_17 = arith.constant 0 : index
    %c0_18 = arith.constant 0 : index
    %23 = vector.load %arg7[%c0_17, %c0_18] : memref<2x128xf32, #tpu.memory_space<vmem>>, vector<2x128xf32>
    tpu.vector_store %arg7[%c0_17, %c0_18], %22 {strides = array<i32>} : memref<2x128xf32, #tpu.memory_space<vmem>>, vector<2x128xf32>,
    return
  }
}

</mosaic_0001>

<llo_original>
// kernel: actor_critic_forward.1
$region0: #{actor_critic_forward.1}
  #allocation0 [shape = 'u32[]', space=smem, size = 0x4, offset = 0x4, fixed_abs, tag = 'smem constant byte address 0x4 - core index']
  #allocation1 [shape = 'u32[144,128]{1,0:T(1,128)}', space=vmem, size = 0x12000, scoped, tag = 'internal scratch']
  %s0 = inlined_call_operand.hbm [shape: f32[2,8], index: 0, kind: input, shape index: {}]
  %s1 = inlined_call_operand.vmem [shape: bf16[8,256], index: 1, kind: input, shape index: {}]
  %s2 = inlined_call_operand.vmem [shape: f32[1,256], index: 2, kind: input, shape index: {}]
  %s3 = inlined_call_operand.hbm [shape: bf16[256,256], index: 3, kind: input, shape index: {}]
  %s4 = inlined_call_operand.vmem [shape: f32[1,256], index: 4, kind: input, shape index: {}]
  %s5 = inlined_call_operand.hbm [shape: bf16[256,128], index: 5, kind: input, shape index: {}]
  %s6 = inlined_call_operand.vmem [shape: f32[1,128], index: 6, kind: input, shape index: {}]
  %s7 = inlined_call_operand.vmem [shape: f32[2,128], index: 7, kind: output, shape index: {}]
  %s8 = sld [smem:[#allocation0]]
  $region50: #{actor_critic_forward.1} parent=0
    _
  %s10 = ssub.s32 1, %s8
  %s11 = scalar_select 0, %s10, %s8
  $region1: #{actor_critic_forward.1} parent=0
    #allocation2 [shape = 'u8[1024]{0}', space=vmem, size = 0x400, scoped, tag = 'input window, operand 0, single buffered']
    #allocation3 [shape = 's32[1]{0}', space=sflag, size = 0x4, scoped, tag = 'scoped memory for actor_critic_forward.1']
    #allocation4 [shape = 'u8[131072]{0}', space=vmem, size = 0x20000, scoped, tag = 'input window, operand 3, single buffered']
    #allocation5 [shape = 's32[1]{0}', space=sflag, size = 0x4, scoped, tag = 'scoped memory for actor_critic_forward.1']
    #allocation6 [shape = 'u8[65536]{0}', space=vmem, size = 0x10000, scoped, tag = 'input window, operand 5, single buffered']
    %12 = vsyncpa [#allocation3], 0
    %13 = vsyncpa [#allocation5], 0
    // Predicated region
    $region2: #{actor_critic_forward.1} parent=1 // pred_check
      _
    $region3: #{actor_critic_forward.1} parent=1 // pred_check_branch
      %15 = sbr.rel (0) target = $region5
    $region4: #{actor_critic_forward.1} parent=1 // pred_region
      %s17 = ssub.s32 32, 32
      %18 = vsyncadd [#allocation3], %s17
      %s20 = sshll.u32 [#allocation2], 4
      %s21 = int_to_ptr.vmem [resolvable:$true] %s20
      %23 = dma.hbm_to_vmem [thread:$0]  %s0, 32, %s21, [#allocation3]
    $region5: #{actor_critic_forward.1} parent=1 // pred_fallthru
      _
    // Predicated region
    $region6: #{actor_critic_forward.1} parent=1 // pred_check
      _
    $region7: #{actor_critic_forward.1} parent=1 // pred_check_branch
      %25 = sbr.rel (0) target = $region9
    $region8: #{actor_critic_forward.1} parent=1 // pred_region
      _
    $region9: #{actor_critic_forward.1} parent=1 // pred_fallthru
      _
    // Predicated region
    $region10: #{actor_critic_forward.1} parent=1 // pred_check
      _
    $region11: #{actor_critic_forward.1} parent=1 // pred_check_branch
      %27 = sbr.rel (0) target = $region13
    $region12: #{actor_critic_forward.1} parent=1 // pred_region
      _
    $region13: #{actor_critic_forward.1} parent=1 // pred_fallthru
      _
    // Predicated region
    $region14: #{actor_critic_forward.1} parent=1 // pred_check
      _
    $region15: #{actor_critic_forward.1} parent=1 // pred_check_branch
      %29 = sbr.rel (0) target = $region17
    $region16: #{actor_critic_forward.1} parent=1 // pred_region
      %s31 = ssub.s32 4096, 4096
      %32 = vsyncadd [#allocation5], %s31
      %s33 = sshll.u32 [#allocation4], 4
      %s34 = int_to_ptr.vmem [resolvable:$true] %s33
      %39 = dma.hbm_to_vmem [thread:$0]  %s3, 4096, %s34, [#allocation5], 128, 128, 8
    $region17: #{actor_critic_forward.1} parent=1 // pred_fallthru
      _
    // Predicated region
    $region18: #{actor_critic_forward.1} parent=1 // pred_check
      _
    $region19: #{actor_critic_forward.1} parent=1 // pred_check_branch
      %41 = sbr.rel (0) target = $region21
    $region20: #{actor_critic_forward.1} parent=1 // pred_region
      _
    $region21: #{actor_critic_forward.1} parent=1 // pred_fallthru
      _
    // Predicated region
    $region22: #{actor_critic_forward.1} parent=1 // pred_check
      _
    $region23: #{actor_critic_forward.1} parent=1 // pred_check_branch
      %43 = sbr.rel (0) target = $region25
    $region24: #{actor_critic_forward.1} parent=1 // pred_region
      %s45 = ssub.s32 2048, 2048
      %46 = vsyncadd [#allocation5], %s45
      %s47 = sshll.u32 [#allocation6], 4
      %s48 = int_to_ptr.vmem [resolvable:$true] %s47
      %53 = dma.hbm_to_vmem [thread:$0]  %s5, 2048, %s48, [#allocation5], 64, 64, 4
    $region25: #{actor_critic_forward.1} parent=1 // pred_fallthru
      _
    // Predicated region
    $region26: #{actor_critic_forward.1} parent=1 // pred_check
      _
    $region27: #{actor_critic_forward.1} parent=1 // pred_check_branch
      %55 = sbr.rel (0) target = $region29
    $region28: #{actor_critic_forward.1} parent=1 // pred_region
      _
    $region29: #{actor_critic_forward.1} parent=1 // pred_fallthru
      _
    // Predicated region
    $region30: #{actor_critic_forward.1} parent=1 // pred_check
      _
    $region31: #{actor_critic_forward.1} parent=1 // pred_check_branch
      %57 = sbr.rel (0) target = $region33
    $region32: #{actor_critic_forward.1} parent=1 // pred_region
      %58 = dma.done [#allocation3], 32
    $region33: #{actor_critic_forward.1} parent=1 // pred_fallthru
      _
    // Predicated region
    $region34: #{actor_critic_forward.1} parent=1 // pred_check
      _
    $region35: #{actor_critic_forward.1} parent=1 // pred_check_branch
      %60 = sbr.rel (0) target = $region37
    $region36: #{actor_critic_forward.1} parent=1 // pred_region
      %61 = dma.done [#allocation5], 4096
    $region37: #{actor_critic_forward.1} parent=1 // pred_fallthru
      _
    // Predicated region
    $region38: #{actor_critic_forward.1} parent=1 // pred_check
      _
    $region39: #{actor_critic_forward.1} parent=1 // pred_check_branch
      %63 = sbr.rel (0) target = $region41
    $region40: #{actor_critic_forward.1} parent=1 // pred_region
      %64 = dma.done [#allocation5], 2048
    $region41: #{actor_critic_forward.1} parent=1 // pred_fallthru
      _
    %v65 = vld [vmem:[#allocation2] sm:$0x3]
    %v66 = vld [vmem:[%s1] sm:$0xff]
    %v67 = vunpack.c.l.bf16 %v66
    %v68 = vunpack.c.h.bf16 %v66
    %v69 = vld [vmem:[#allocation4] sm:$0xff]
    %v70 = vld [vmem:[#allocation4 + $0x8] sm:$0xff]
    %v71 = vld [vmem:[#allocation4 + $0x10] sm:$0xff]
    %v72 = vld [vmem:[#allocation4 + $0x18] sm:$0xff]
    %v73 = vld [vmem:[#allocation4 + $0x20] sm:$0xff]
    %v74 = vld [vmem:[#allocation4 + $0x28] sm:$0xff]
    %v75 = vld [vmem:[#allocation4 + $0x30] sm:$0xff]
    %v76 = vld [vmem:[#allocation4 + $0x38] sm:$0xff]
    %v77 = vld [vmem:[#allocation4 + $0x40] sm:$0xff]
    %v78 = vld [vmem:[#allocation4 + $0x48] sm:$0xff]
    %v79 = vld [vmem:[#allocation4 + $0x50] sm:$0xff]
    %v80 = vld [vmem:[#allocation4 + $0x58] sm:$0xff]
    %v81 = vld [vmem:[#allocation4 + $0x60] sm:$0xff]
    %v82 = vld [vmem:[#allocation4 + $0x68] sm:$0xff]
    %v83 = vld [vmem:[#allocation4 + $0x70] sm:$0xff]
    %v84 = vld [vmem:[#allocation4 + $0x78] sm:$0xff]
    %v85 = vld [vmem:[#allocation4 + $0x80] sm:$0xff]
    %v86 = vld [vmem:[#allocation4 + $0x88] sm:$0xff]
    %v87 = vld [vmem:[#allocation4 + $0x90] sm:$0xff]
    %v88 = vld [vmem:[#allocation4 + $0x98] sm:$0xff]
    %v89 = vld [vmem:[#allocation4 + $0xa0] sm:$0xff]
    %v90 = vld [vmem:[#allocation4 + $0xa8] sm:$0xff]
    %v91 = vld [vmem:[#allocation4 + $0xb0] sm:$0xff]
    %v92 = vld [vmem:[#allocation4 + $0xb8] sm:$0xff]
    %v93 = vld [vmem:[#allocation4 + $0xc0] sm:$0xff]
    %v94 = vld [vmem:[#allocation4 + $0xc8] sm:$0xff]
    %v95 = vld [vmem:[#allocation4 + $0xd0] sm:$0xff]
    %v96 = vld [vmem:[#allocation4 + $0xd8] sm:$0xff]
    %v97 = vld [vmem:[#allocation4 + $0xe0] sm:$0xff]
    %v98 = vld [vmem:[#allocation4 + $0xe8] sm:$0xff]
    %v99 = vld [vmem:[#allocation4 + $0xf0] sm:$0xff]
    %v100 = vld [vmem:[#allocation4 + $0xf8] sm:$0xff]
    %v101 = vunpack.c.l.bf16 %v69
    %v102 = vunpack.c.h.bf16 %v69
    %v103 = vunpack.c.l.bf16 %v70
    %v104 = vunpack.c.h.bf16 %v70
    %v105 = vunpack.c.l.bf16 %v71
    %v106 = vunpack.c.h.bf16 %v71
    %v107 = vunpack.c.l.bf16 %v72
    %v108 = vunpack.c.h.bf16 %v72
    %v109 = vunpack.c.l.bf16 %v73
    %v110 = vunpack.c.h.bf16 %v73
    %v111 = vunpack.c.l.bf16 %v74
    %v112 = vunpack.c.h.bf16 %v74
    %v113 = vunpack.c.l.bf16 %v75
    %v114 = vunpack.c.h.bf16 %v75
    %v115 = vunpack.c.l.bf16 %v76
    %v116 = vunpack.c.h.bf16 %v76
    %v117 = vunpack.c.l.bf16 %v77
    %v118 = vunpack.c.h.bf16 %v77
    %v119 = vunpack.c.l.bf16 %v78
    %v120 = vunpack.c.h.bf16 %v78
    %v121 = vunpack.c.l.bf16 %v79
    %v122 = vunpack.c.h.bf16 %v79
    %v123 = vunpack.c.l.bf16 %v80
    %v124 = vunpack.c.h.bf16 %v80
    %v125 = vunpack.c.l.bf16 %v81
    %v126 = vunpack.c.h.bf16 %v81
    %v127 = vunpack.c.l.bf16 %v82
    %v128 = vunpack.c.h.bf16 %v82
    %v129 = vunpack.c.l.bf16 %v83
    %v130 = vunpack.c.h.bf16 %v83
    %v131 = vunpack.c.l.bf16 %v84
    %v132 = vunpack.c.h.bf16 %v84
    %v133 = vunpack.c.l.bf16 %v85
    %v134 = vunpack.c.h.bf16 %v85
    %v135 = vunpack.c.l.bf16 %v86
    %v136 = vunpack.c.h.bf16 %v86
    %v137 = vunpack.c.l.bf16 %v87
    %v138 = vunpack.c.h.bf16 %v87
    %v139 = vunpack.c.l.bf16 %v88
    %v140 = vunpack.c.h.bf16 %v88
    %v141 = vunpack.c.l.bf16 %v89
    %v142 = vunpack.c.h.bf16 %v89
    %v143 = vunpack.c.l.bf16 %v90
    %v144 = vunpack.c.h.bf16 %v90
    %v145 = vunpack.c.l.bf16 %v91
    %v146 = vunpack.c.h.bf16 %v91
    %v147 = vunpack.c.l.bf16 %v92
    %v148 = vunpack.c.h.bf16 %v92
    %v149 = vunpack.c.l.bf16 %v93
    %v150 = vunpack.c.h.bf16 %v93
    %v151 = vunpack.c.l.bf16 %v94
    %v152 = vunpack.c.h.bf16 %v94
    %v153 = vunpack.c.l.bf16 %v95
    %v154 = vunpack.c.h.bf16 %v95
    %v155 = vunpack.c.l.bf16 %v96
    %v156 = vunpack.c.h.bf16 %v96
    %v157 = vunpack.c.l.bf16 %v97
    %v158 = vunpack.c.h.bf16 %v97
    %v159 = vunpack.c.l.bf16 %v98
    %v160 = vunpack.c.h.bf16 %v98
    %v161 = vunpack.c.l.bf16 %v99
    %v162 = vunpack.c.h.bf16 %v99
    %v163 = vunpack.c.l.bf16 %v100
    %v164 = vunpack.c.h.bf16 %v100
    %v165 = vld [vmem:[#allocation6] sm:$0xf]
    %v166 = vld [vmem:[#allocation6 + $0x4] sm:$0xf]
    %v167 = vld [vmem:[#allocation6 + $0x8] sm:$0xf]
    %v168 = vld [vmem:[#allocation6 + $0xc] sm:$0xf]
    %v169 = vld [vmem:[#allocation6 + $0x10] sm:$0xf]
    %v170 = vld [vmem:[#allocation6 + $0x14] sm:$0xf]
    %v171 = vld [vmem:[#allocation6 + $0x18] sm:$0xf]
    %v172 = vld [vmem:[#allocation6 + $0x1c] sm:$0xf]
    %v173 = vld [vmem:[#allocation6 + $0x20] sm:$0xf]
    %v174 = vld [vmem:[#allocation6 + $0x24] sm:$0xf]
    %v175 = vld [vmem:[#allocation6 + $0x28] sm:$0xf]
    %v176 = vld [vmem:[#allocation6 + $0x2c] sm:$0xf]
    %v177 = vld [vmem:[#allocation6 + $0x30] sm:$0xf]
    %v178 = vld [vmem:[#allocation6 + $0x34] sm:$0xf]
    %v179 = vld [vmem:[#allocation6 + $0x38] sm:$0xf]
    %v180 = vld [vmem:[#allocation6 + $0x3c] sm:$0xf]
    %v181 = vld [vmem:[#allocation6 + $0x40] sm:$0xf]
    %v182 = vld [vmem:[#allocation6 + $0x44] sm:$0xf]
    %v183 = vld [vmem:[#allocation6 + $0x48] sm:$0xf]
    %v184 = vld [vmem:[#allocation6 + $0x4c] sm:$0xf]
    %v185 = vld [vmem:[#allocation6 + $0x50] sm:$0xf]
    %v186 = vld [vmem:[#allocation6 + $0x54] sm:$0xf]
    %v187 = vld [vmem:[#allocation6 + $0x58] sm:$0xf]
    %v188 = vld [vmem:[#allocation6 + $0x5c] sm:$0xf]
    %v189 = vld [vmem:[#allocation6 + $0x60] sm:$0xf]
    %v190 = vld [vmem:[#allocation6 + $0x64] sm:$0xf]
    %v191 = vld [vmem:[#allocation6 + $0x68] sm:$0xf]
    %v192 = vld [vmem:[#allocation6 + $0x6c] sm:$0xf]
    %v193 = vld [vmem:[#allocation6 + $0x70] sm:$0xf]
    %v194 = vld [vmem:[#allocation6 + $0x74] sm:$0xf]
    %v195 = vld [vmem:[#allocation6 + $0x78] sm:$0xf]
    %v196 = vld [vmem:[#allocation6 + $0x7c] sm:$0xf]
    %v197 = vunpack.c.l.bf16 %v165
    %v198 = vunpack.c.l.bf16 %v166
    %v199 = vunpack.c.l.bf16 %v167
    %v200 = vunpack.c.l.bf16 %v168
    %v201 = vunpack.c.l.bf16 %v169
    %v202 = vunpack.c.l.bf16 %v170
    %v203 = vunpack.c.l.bf16 %v171
    %v204 = vunpack.c.l.bf16 %v172
    %v205 = vunpack.c.l.bf16 %v173
    %v206 = vunpack.c.l.bf16 %v174
    %v207 = vunpack.c.l.bf16 %v175
    %v208 = vunpack.c.l.bf16 %v176
    %v209 = vunpack.c.l.bf16 %v177
    %v210 = vunpack.c.l.bf16 %v178
    %v211 = vunpack.c.l.bf16 %v179
    %v212 = vunpack.c.l.bf16 %v180
    %v213 = vunpack.c.l.bf16 %v181
    %v214 = vunpack.c.l.bf16 %v182
    %v215 = vunpack.c.l.bf16 %v183
    %v216 = vunpack.c.l.bf16 %v184
    %v217 = vunpack.c.l.bf16 %v185
    %v218 = vunpack.c.l.bf16 %v186
    %v219 = vunpack.c.l.bf16 %v187
    %v220 = vunpack.c.l.bf16 %v188
    %v221 = vunpack.c.l.bf16 %v189
    %v222 = vunpack.c.l.bf16 %v190
    %v223 = vunpack.c.l.bf16 %v191
    %v224 = vunpack.c.l.bf16 %v192
    %v225 = vunpack.c.l.bf16 %v193
    %v226 = vunpack.c.l.bf16 %v194
    %v227 = vunpack.c.l.bf16 %v195
    %v228 = vunpack.c.l.bf16 %v196
    %v229 = vld [vmem:[%s2] sm:$0x3]
    %v231 = vlaneseq
    %v232 = vshrl.u32 %v231, 7
    %v233 = vsub.s32 0, %v232
    %v234 = vrot.slane %v229, %v233
    %v235 = vlaneseq
    %v236 = vshrl.u32 %v235, 7
    %v237 = vsub.s32 1, %v236
    %v238 = vrot.slane %v229, %v237
    %vm241 = vcmask 64512
    %v243 = vsel %vm241, %v65, 0
    %245 = vmatprep.subr.mxu0 %v68
    %246 = vmatpush1.msra.mxu0 %v67
    %247 = vmatprep.subr.mxu0 0.0
    %248 = vmatpush1.msra.mxu0 0.0
    %249 = vmatprep.subr.mxu0 0.0
    %250 = vmatpush1.msra.mxu0 0.0
    %251 = vmatprep.subr.mxu0 0.0
    %252 = vmatpush1.msra.mxu0 0.0
    %253 = vmatprep.subr.mxu0 0.0
    %254 = vmatpush1.msra.mxu0 0.0
    %255 = vmatprep.subr.mxu0 0.0
    %256 = vmatpush1.msra.mxu0 0.0
    %257 = vmatprep.subr.mxu0 0.0
    %258 = vmatpush1.msra.mxu0 0.0
    %259 = vmatprep.subr.mxu0 0.0
    %260 = vmatpush1.msra.mxu0 0.0
    %261 = vmatprep.subr.mxu0 0.0
    %262 = vmatpush1.msra.mxu0 0.0
    %263 = vmatprep.subr.mxu0 0.0
    %264 = vmatpush1.msra.mxu0 0.0
    %265 = vmatprep.subr.mxu0 0.0
    %266 = vmatpush1.msra.mxu0 0.0
    %267 = vmatprep.subr.mxu0 0.0
    %268 = vmatpush1.msra.mxu0 0.0
    %269 = vmatprep.subr.mxu0 0.0
    %270 = vmatpush1.msra.mxu0 0.0
    %271 = vmatprep.subr.mxu0 0.0
    %272 = vmatpush1.msra.mxu0 0.0
    %273 = vmatprep.subr.mxu0 0.0
    %274 = vmatpush1.msra.mxu0 0.0
    %275 = vmatprep.subr.mxu0 0.0
    %276 = vmatpush1.msra.mxu0 0.0
    %277 = vmatprep.subr.mxu0 0.0
    %278 = vmatpush1.msra.mxu0 0.0
    %279 = vmatprep.subr.mxu0 0.0
    %280 = vmatpush1.msra.mxu0 0.0
    %281 = vmatprep.subr.mxu0 0.0
    %282 = vmatpush1.msra.mxu0 0.0
    %283 = vmatprep.subr.mxu0 0.0
    %284 = vmatpush1.msra.mxu0 0.0
    %285 = vmatprep.subr.mxu0 0.0
    %286 = vmatpush1.msra.mxu0 0.0
    %287 = vmatprep.subr.mxu0 0.0
    %288 = vmatpush1.msra.mxu0 0.0
    %289 = vmatprep.subr.mxu0 0.0
    %290 = vmatpush1.msra.mxu0 0.0
    %291 = vmatprep.subr.mxu0 0.0
    %292 = vmatpush1.msra.mxu0 0.0
    %293 = vmatprep.subr.mxu0 0.0
    %294 = vmatpush1.msra.mxu0 0.0
    %295 = vmatprep.subr.mxu0 0.0
    %296 = vmatpush1.msra.mxu0 0.0
    %297 = vmatprep.subr.mxu0 0.0
    %298 = vmatpush1.msra.mxu0 0.0
    %299 = vmatprep.subr.mxu0 0.0
    %300 = vmatpush1.msra.mxu0 0.0
    %301 = vmatprep.subr.mxu0 0.0
    %302 = vmatpush1.msra.mxu0 0.0
    %303 = vmatprep.subr.mxu0 0.0
    %304 = vmatpush1.msra.mxu0 0.0
    %305 = vmatprep.subr.mxu0 0.0
    %306 = vmatpush1.msra.mxu0 0.0
    %307 = vmatprep.subr.mxu0 0.0
    %308 = vmatpush1.msra.mxu0 0.0
    %309 = vmatprep.mubr.f32.mxu0 0.0
    %310 = vmatmul.mubr.f32.gmra.mrb[0].mxu0 %v243
    %v311 = vpop.f32.mrb[0].mxu0
    %v312 = vadd.f32 %v234, %v311
    %v313 = vpop.f32.mrb[0].mxu0
    %v314 = vadd.f32 %v238, %v313
    %315 = vdwg.mxu0
    %v316 = vmax.f32 %v312, 0.0
    %v317 = vmax.f32 %v314, 0.0
    %v318 = vld [vmem:[%s4] sm:$0x3]
    %v320 = vlaneseq
    %v321 = vshrl.u32 %v320, 7
    %v322 = vsub.s32 0, %v321
    %v323 = vrot.slane %v318, %v322
    %v324 = vlaneseq
    %v325 = vshrl.u32 %v324, 7
    %v326 = vsub.s32 1, %v325
    %v327 = vrot.slane %v318, %v326
    %330 = vmatprep.subr.mxu0 %v102
    %331 = vmatpush1.msra.mxu0 %v101
    %332 = vmatprep.subr.mxu0 %v104
    %333 = vmatpush1.msra.mxu0 %v103
    %334 = vmatprep.subr.mxu0 %v106
    %335 = vmatpush1.msra.mxu0 %v105
    %336 = vmatprep.subr.mxu0 %v108
    %337 = vmatpush1.msra.mxu0 %v107
    %338 = vmatprep.subr.mxu0 %v110
    %339 = vmatpush1.msra.mxu0 %v109
    %340 = vmatprep.subr.mxu0 %v112
    %341 = vmatpush1.msra.mxu0 %v111
    %342 = vmatprep.subr.mxu0 %v114
    %343 = vmatpush1.msra.mxu0 %v113
    %344 = vmatprep.subr.mxu0 %v116
    %345 = vmatpush1.msra.mxu0 %v115
    %346 = vmatprep.subr.mxu0 %v118
    %347 = vmatpush1.msra.mxu0 %v117
    %348 = vmatprep.subr.mxu0 %v120
    %349 = vmatpush1.msra.mxu0 %v119
    %350 = vmatprep.subr.mxu0 %v122
    %351 = vmatpush1.msra.mxu0 %v121
    %352 = vmatprep.subr.mxu0 %v124
    %353 = vmatpush1.msra.mxu0 %v123
    %354 = vmatprep.subr.mxu0 %v126
    %355 = vmatpush1.msra.mxu0 %v125
    %356 = vmatprep.subr.mxu0 %v128
    %357 = vmatpush1.msra.mxu0 %v127
    %358 = vmatprep.subr.mxu0 %v130
    %359 = vmatpush1.msra.mxu0 %v129
    %360 = vmatprep.subr.mxu0 %v132
    %361 = vmatpush1.msra.mxu0 %v131
    %362 = vmatprep.subr.mxu0 %v134
    %363 = vmatpush1.msra.mxu0 %v133
    %364 = vmatprep.subr.mxu0 %v136
    %365 = vmatpush1.msra.mxu0 %v135
    %366 = vmatprep.subr.mxu0 %v138
    %367 = vmatpush1.msra.mxu0 %v137
    %368 = vmatprep.subr.mxu0 %v140
    %369 = vmatpush1.msra.mxu0 %v139
    %370 = vmatprep.subr.mxu0 %v142
    %371 = vmatpush1.msra.mxu0 %v141
    %372 = vmatprep.subr.mxu0 %v144
    %373 = vmatpush1.msra.mxu0 %v143
    %374 = vmatprep.subr.mxu0 %v146
    %375 = vmatpush1.msra.mxu0 %v145
    %376 = vmatprep.subr.mxu0 %v148
    %377 = vmatpush1.msra.mxu0 %v147
    %378 = vmatprep.subr.mxu0 %v150
    %379 = vmatpush1.msra.mxu0 %v149
    %380 = vmatprep.subr.mxu0 %v152
    %381 = vmatpush1.msra.mxu0 %v151
    %382 = vmatprep.subr.mxu0 %v154
    %383 = vmatpush1.msra.mxu0 %v153
    %384 = vmatprep.subr.mxu0 %v156
    %385 = vmatpush1.msra.mxu0 %v155
    %386 = vmatprep.subr.mxu0 %v158
    %387 = vmatpush1.msra.mxu0 %v157
    %388 = vmatprep.subr.mxu0 %v160
    %389 = vmatpush1.msra.mxu0 %v159
    %390 = vmatprep.subr.mxu0 %v162
    %391 = vmatpush1.msra.mxu0 %v161
    %392 = vmatprep.subr.mxu0 %v164
    %393 = vmatpush1.msra.mxu0 %v163
    %394 = vmatprep.mubr.f32.mxu0 %v317
    %395 = vmatmul.mubr.f32.gmra.mrb[0].mxu0 %v316
    %v396 = vpop.f32.mrb[0].mxu0
    %v397 = vadd.f32 %v323, %v396
    %v398 = vpop.f32.mrb[0].mxu0
    %v399 = vadd.f32 %v327, %v398
    %400 = vdwg.mxu0
    %v401 = vmax.f32 %v397, 0.0
    %v402 = vmax.f32 %v399, 0.0
    %v403 = vld [vmem:[%s6] sm:$0x1]
    %v405 = vlaneseq
    %v406 = vshrl.u32 %v405, 7
    %v407 = vsub.s32 0, %v406
    %v408 = vrot.slane %v403, %v407
    %410 = vmatprep.subr.mxu0 0.0
    %411 = vmatpush1.msra.mxu0 %v197
    %412 = vmatprep.subr.mxu0 0.0
    %413 = vmatpush1.msra.mxu0 %v198
    %414 = vmatprep.subr.mxu0 0.0
    %415 = vmatpush1.msra.mxu0 %v199
    %416 = vmatprep.subr.mxu0 0.0
    %417 = vmatpush1.msra.mxu0 %v200
    %418 = vmatprep.subr.mxu0 0.0
    %419 = vmatpush1.msra.mxu0 %v201
    %420 = vmatprep.subr.mxu0 0.0
    %421 = vmatpush1.msra.mxu0 %v202
    %422 = vmatprep.subr.mxu0 0.0
    %423 = vmatpush1.msra.mxu0 %v203
    %424 = vmatprep.subr.mxu0 0.0
    %425 = vmatpush1.msra.mxu0 %v204
    %426 = vmatprep.subr.mxu0 0.0
    %427 = vmatpush1.msra.mxu0 %v205
    %428 = vmatprep.subr.mxu0 0.0
    %429 = vmatpush1.msra.mxu0 %v206
    %430 = vmatprep.subr.mxu0 0.0
    %431 = vmatpush1.msra.mxu0 %v207
    %432 = vmatprep.subr.mxu0 0.0
    %433 = vmatpush1.msra.mxu0 %v208
    %434 = vmatprep.subr.mxu0 0.0
    %435 = vmatpush1.msra.mxu0 %v209
    %436 = vmatprep.subr.mxu0 0.0
    %437 = vmatpush1.msra.mxu0 %v210
    %438 = vmatprep.subr.mxu0 0.0
    %439 = vmatpush1.msra.mxu0 %v211
    %440 = vmatprep.subr.mxu0 0.0
    %441 = vmatpush1.msra.mxu0 %v212
    %442 = vmatprep.subr.mxu0 0.0
    %443 = vmatpush1.msra.mxu0 %v213
    %444 = vmatprep.subr.mxu0 0.0
    %445 = vmatpush1.msra.mxu0 %v214
    %446 = vmatprep.subr.mxu0 0.0
    %447 = vmatpush1.msra.mxu0 %v215
    %448 = vmatprep.subr.mxu0 0.0
    %449 = vmatpush1.msra.mxu0 %v216
    %450 = vmatprep.subr.mxu0 0.0
    %451 = vmatpush1.msra.mxu0 %v217
    %452 = vmatprep.subr.mxu0 0.0
    %453 = vmatpush1.msra.mxu0 %v218
    %454 = vmatprep.subr.mxu0 0.0
    %455 = vmatpush1.msra.mxu0 %v219
    %456 = vmatprep.subr.mxu0 0.0
    %457 = vmatpush1.msra.mxu0 %v220
    %458 = vmatprep.subr.mxu0 0.0
    %459 = vmatpush1.msra.mxu0 %v221
    %460 = vmatprep.subr.mxu0 0.0
    %461 = vmatpush1.msra.mxu0 %v222
    %462 = vmatprep.subr.mxu0 0.0
    %463 = vmatpush1.msra.mxu0 %v223
    %464 = vmatprep.subr.mxu0 0.0
    %465 = vmatpush1.msra.mxu0 %v224
    %466 = vmatprep.subr.mxu0 0.0
    %467 = vmatpush1.msra.mxu0 %v225
    %468 = vmatprep.subr.mxu0 0.0
    %469 = vmatpush1.msra.mxu0 %v226
    %470 = vmatprep.subr.mxu0 0.0
    %471 = vmatpush1.msra.mxu0 %v227
    %472 = vmatprep.subr.mxu0 0.0
    %473 = vmatpush1.msra.mxu0 %v228
    %474 = vmatprep.mubr.f32.mxu0 %v402
    %475 = vmatmul.mubr.f32.gmra.mrb[0].mxu0 %v401
    %v476 = vpop.f32.mrb[0].mxu0
    %v477 = vadd.f32 %v408, %v476
    %v478 = vpop.f32.mrb[0].mxu0
    %479 = vdwg.mxu0
    %480 = vst [vmem:[%s7] sm:$0x3] %v477
    // Predicated region
    $region42: #{actor_critic_forward.1} parent=1 // pred_check
      _
    $region43: #{actor_critic_forward.1} parent=1 // pred_check_branch
      %482 = sbr.rel (0) target = $region45
    $region44: #{actor_critic_forward.1} parent=1 // pred_region
      _
    $region45: #{actor_critic_forward.1} parent=1 // pred_fallthru
      _
    // Predicated region
    $region46: #{actor_critic_forward.1} parent=1 // pred_check
      _
    $region47: #{actor_critic_forward.1} parent=1 // pred_check_branch
      %484 = sbr.rel (0) target = $region49
    $region48: #{actor_critic_forward.1} parent=1 // pred_region
      _
    $region49: #{actor_critic_forward.1} parent=1 // pred_fallthru
      _
    %485 = vsyncpa [#allocation3], 1
    %486 = vsyncpa [#allocation5], 1

</llo_original>
